<compile_context>
chip_gen: v5e
topology: v5e:2x2
jax: 0.10.0
libtpu: 0.0.40
codegen_flags: <defaults>
</compile_context>

<pallas_src>
import jax
import jax.numpy as jnp
from jax import lax
from jax.experimental import pallas as pl
from jax.experimental.pallas import tpu as pltpu

POWER = 2                          # matches Normalize(power=2)
_LANE = 128
_SUBLANE = 16                      # multiple of 8 (f32) and 16 (bf16) sublane tiling
_TARGET_HBM_BLOCK_BYTES = 4 << 20  # per-block HBM traffic target (per array)
_MAX_F32_GENERAL_BYTES = 8 << 20   # f32 working-set cap, general path
_MAX_F32_PACKED_BYTES = 4 << 20    # packed path keeps extra f32 matmul operands live
_VMEM_LIMIT_BYTES = 48 << 20       # > v5e 16 MiB default scoped; < v7x 64 MiB physical


def _cdiv(a, b):
    return -(-a // b)


def _round_up(a, b):
    return _cdiv(a, b) * b


def _normalize_kernel(x_ref, o_ref):
    """General path: the full feature dim D lives in the lane axis of each block."""
    x = x_ref[...].astype(jnp.float32)                    # (tile_rows, D)
    s = jnp.sum(x * x, axis=-1, keepdims=True)            # (tile_rows, 1)
    # NOTE: all-zero rows give rsqrt(0)=inf -> NaN, matching torch's x.div(norm)
    # (the reference module has no eps clamp).
    o_ref[...] = (x * lax.rsqrt(s)).astype(o_ref.dtype)   # 1 rsqrt/row + broadcast mul


def _normalize_packed_kernel(x_ref, seg_ref, o_ref):
    """Lane-dense path for small D: `pack` logical rows share one 128-lane row.

    seg is a (128, 128) block-diagonal matrix of ones (D x D blocks); (x*x) @ seg
    gives every lane its own segment's sum-of-squares (reduction + broadcast in a
    single MXU op, keeping loads/stores 128-lane dense).
    """
    x = x_ref[...].astype(jnp.float32)                    # (tile_rows, 128)
    seg = seg_ref[...]                                    # (128, 128) f32 zeros/ones
    xx = x * x
    # Split-accumulate so the segmented reduction stays ~f32-accurate even though
    # the MXU rounds matmul operands to bf16.
    # TODO(synk): drop the hi/lo split (single higher-precision dot) if ~bf16-level
    # accuracy on the norm is acceptable; trims ~3 VPU ops/elem + one MXU pass.
    hi = xx.astype(jnp.bfloat16).astype(jnp.float32)
    lo = xx - hi
    s = (jnp.dot(hi, seg, preferred_element_type=jnp.float32)
         + jnp.dot(lo, seg, preferred_element_type=jnp.float32))
    o_ref[...] = (x * lax.rsqrt(s)).astype(o_ref.dtype)


def _choose_tile_rows(rows, lane_dim, itemsize, max_f32_block_bytes):
    """Row tile targeting ~4 MiB HBM-side blocks, capped by the f32 working set.

    Per-grid-step overhead is ~0.35 us, so big blocks keep the kernel near the HBM
    roofline; the explicit vmem_limit_bytes below gives the double-buffered I/O
    plus in-kernel f32 temporaries room on all of v5e/v6e/v7x.
    """
    hbm_rows = _TARGET_HBM_BLOCK_BYTES // max(lane_dim * itemsize, 1)
    f32_rows = max_f32_block_bytes // max(lane_dim * 4, 1)
    tile = max(_SUBLANE, min(hbm_rows, f32_rows) // _SUBLANE * _SUBLANE)
    # Aim for >= 4 grid steps (>= 2 per v7x TensorCore) when there is enough work,
    # so each core still gets double-buffer overlap; ~neutral on v5e/v6e (1 TC).
    if rows >= 4 * _SUBLANE:
        tile = min(tile, _round_up(_cdiv(rows, 4), _SUBLANE))
    if tile >= rows:
        return rows            # one full-extent block (legal even if rows % 8 != 0)
    return tile                # multiple of _SUBLANE; ragged tail masked by Pallas


def normalize(x, power=POWER):
    """Lp-normalize rows of a (N, D) array over dim=1 (fast rsqrt path, power=2)."""
    if power != 2:
        # TODO(synk): general `power` needs an exp/log path; the module default is 2.
        raise NotImplementedError("only power=2 is implemented")
    assert x.ndim == 2, "expected (N, D) features (dim=1 reduction)"
    N, D = x.shape
    out_dtype = x.dtype
    itemsize = jnp.dtype(out_dtype).itemsize

    # Pack several rows into one 128-lane row when D is small, so HBM loads/stores
    # are lane-dense (D=32 alone would use only 25% of each vreg's lanes).
    # TODO(synk): D with 128 % D != 0 and D % 128 != 0 (e.g. 96, 192) still falls to
    # the (correct but partially masked) general path; could pad D in lane layout.
    pack = _LANE // D if (D < _LANE and _LANE % D == 0) else 1
    lane_dim = D * pack

    n_rows_in = N
    if pack > 1 and N % pack != 0:
        # Rare fallback: pad a few rows so the row-major reshape into the lane-dense
        # layout stays a free view.  Padded segments yield NaN but are sliced off and
        # cannot contaminate live lanes (block-diagonal seg matrix).
        n_rows_in = _round_up(N, pack)
        x = jnp.pad(x, ((0, n_rows_in - N), (0, 0)))
    rows = n_rows_in // pack
    x_packed = x.reshape(rows, lane_dim)                  # free row-major view

    max_f32 = _MAX_F32_PACKED_BYTES if pack > 1 else _MAX_F32_GENERAL_BYTES
    tile_rows = _choose_tile_rows(rows, lane_dim, itemsize, max_f32)
    grid = (_cdiv(rows, tile_rows),)   # ragged tail handled in-kernel by block masking

    x_spec = pl.BlockSpec((tile_rows, lane_dim), lambda i: (i, 0))
    out_spec = pl.BlockSpec((tile_rows, lane_dim), lambda i: (i, 0))
    out_shape = jax.ShapeDtypeStruct((rows, lane_dim), out_dtype)
    params = pltpu.CompilerParams(dimension_semantics=("parallel",),
                                  vmem_limit_bytes=_VMEM_LIMIT_BYTES)

    if pack == 1:
        cost = pl.CostEstimate(
            flops=3 * rows * lane_dim,
            transcendentals=rows,
            bytes_accessed=2 * rows * lane_dim * itemsize,
        )
        out = pl.pallas_call(
            _normalize_kernel,
            out_shape=out_shape,
            grid_spec=pl.GridSpec(grid=grid, in_specs=[x_spec], out_specs=out_spec),
            compiler_params=params,
            cost_estimate=cost,
        )(x_packed)
    else:
        # Block-diagonal ones: seg[i, j] = 1 iff lanes i and j belong to the same
        # D-wide segment (i.e. the same original row).
        li = lax.broadcasted_iota(jnp.int32, (lane_dim, lane_dim), 0) // D
        lj = lax.broadcasted_iota(jnp.int32, (lane_dim, lane_dim), 1) // D
        seg = (li == lj).astype(jnp.float32)
        seg_spec = pl.BlockSpec((lane_dim, lane_dim), lambda i: (0, 0))
        cost = pl.CostEstimate(
            flops=3 * rows * lane_dim + 2 * (2 * rows * lane_dim * lane_dim),
            transcendentals=rows * lane_dim,
            bytes_accessed=2 * rows * lane_dim * itemsize + lane_dim * lane_dim * 4,
        )
        out = pl.pallas_call(
            _normalize_packed_kernel,
            out_shape=out_shape,
            grid_spec=pl.GridSpec(grid=grid, in_specs=[x_spec, seg_spec],
                                  out_specs=out_spec),
            compiler_params=params,
            cost_estimate=cost,
        )(x_packed, seg)

    out = out.reshape(n_rows_in, D)
    if n_rows_in != N:
        out = out[:N]
    return out


if __name__ == "__main__":
    def ref_norm(a):
        a32 = a.astype(jnp.float32)
        return (a32 / jnp.sqrt(jnp.sum(a32 * a32, axis=1, keepdims=True))).astype(a.dtype)

    # 1) Small D -> lane-dense packed path (4 logical rows per 128-lane row).
    x1 = jax.random.normal(jax.random.PRNGKey(0), (16, 32), dtype=jnp.float32)
    o1 = normalize(x1)
    jax.block_until_ready(o1)
    assert o1.shape == x1.shape and o1.dtype == x1.dtype
    assert jnp.allclose(o1, ref_norm(x1), atol=1e-5, rtol=1e-5), "packed path mismatch"

    # 2) Wide D, N not a multiple of 8 -> single full-extent block, no padding.
    x2 = jax.random.normal(jax.random.PRNGKey(1), (20, 256), dtype=jnp.float32)
    o2 = normalize(x2)
    jax.block_until_ready(o2)
    assert o2.shape == x2.shape and o2.dtype == x2.dtype
    assert jnp.allclose(o2, ref_norm(x2), atol=1e-5, rtol=1e-5), "general path mismatch"

    # 3) Multi-block ragged grid (rows % tile_rows != 0) -> no wrapper-side pad copy.
    x3 = jax.random.normal(jax.random.PRNGKey(2), (300, 128), dtype=jnp.float32)
    o3 = normalize(x3)
    jax.block_until_ready(o3)
    assert jnp.allclose(o3, ref_norm(x3), atol=1e-5, rtol=1e-5), "ragged path mismatch"

    # 4) bf16 input with N % pack != 0 -> tiny pad fallback + dtype-aware tiling.
    x4 = jax.random.normal(jax.random.PRNGKey(3), (19, 64), dtype=jnp.bfloat16)
    o4 = normalize(x4)
    jax.block_until_ready(o4)
    assert o4.shape == x4.shape and o4.dtype == jnp.bfloat16
    assert jnp.allclose(o4.astype(jnp.float32), ref_norm(x4).astype(jnp.float32),
                        atol=2e-2, rtol=2e-2), "bf16 path mismatch"

    print("KERNEL_OK")
</pallas_src>

<mosaic_0001>
module attributes {stable_mosaic.version = 11 : i64} {
  func.func @_normalize_packed_kernel(%arg0: i32, %arg1: memref<4x128xf32, #tpu.memory_space<vmem>>, %arg2: memref<128x128xf32, #tpu.memory_space<vmem>>, %arg3: memref<4x128xf32, #tpu.memory_space<vmem>>) attributes {dimension_semantics = [#tpu.dimension_semantics<parallel>], iteration_bounds = array<i64: 1>, scalar_prefetch = 0 : i64, scratch_operands = 0 : i64, tpu.core_type = #tpu.core_type<tc>, window_params = [{transform_indices = @transform_0, window_bounds = array<i64: 4, 128>}, {pipeline_mode = #tpu.pipeline_mode<synchronous>, transform_indices = @transform_1, window_bounds = array<i64: 128, 128>}, {transform_indices = @transform_2, window_bounds = array<i64: 4, 128>}]} {
    %c0 = arith.constant 0 : index
    %c0_0 = arith.constant 0 : index
    %0 = vector.load %arg1[%c0, %c0_0] : memref<4x128xf32, #tpu.memory_space<vmem>>, vector<4x128xf32>
    %c0_1 = arith.constant 0 : index
    %c0_2 = arith.constant 0 : index
    %1 = vector.load %arg2[%c0_1, %c0_2] : memref<128x128xf32, #tpu.memory_space<vmem>>, vector<128x128xf32>
    %2 = arith.mulf %0, %0 : vector<4x128xf32>
    %3 = arith.truncf %2 : vector<4x128xf32> to vector<4x128xbf16>
    %4 = arith.extf %3 : vector<4x128xbf16> to vector<4x128xf32>
    %5 = arith.subf %2, %4 : vector<4x128xf32>
    %cst = arith.constant dense<0.000000e+00> : vector<4x128xf32>
    %6 = tpu.matmul %4, %1, %cst {dimension_numbers = #tpu.dot_dimension_numbers<[1], [0], [0], [1], [0, 0, 1, 1], [], []>} : vector<4x128xf32>, vector<128x128xf32>, vector<4x128xf32> -> vector<4x128xf32>
    %cst_3 = arith.constant dense<0.000000e+00> : vector<4x128xf32>
    %7 = tpu.matmul %5, %1, %cst_3 {dimension_numbers = #tpu.dot_dimension_numbers<[1], [0], [0], [1], [0, 0, 1, 1], [], []>} : vector<4x128xf32>, vector<128x128xf32>, vector<4x128xf32> -> vector<4x128xf32>
    %8 = arith.addf %6, %7 : vector<4x128xf32>
    %9 = math.rsqrt %8 : vector<4x128xf32>
    %10 = arith.mulf %0, %9 : vector<4x128xf32>
    %c0_4 = arith.constant 0 : index
    %c0_5 = arith.constant 0 : index
    %11 = vector.load %arg3[%c0_4, %c0_5] : memref<4x128xf32, #tpu.memory_space<vmem>>, vector<4x128xf32>
    tpu.vector_store %arg3[%c0_4, %c0_5], %10 {strides = array<i32>} : memref<4x128xf32, #tpu.memory_space<vmem>>, vector<4x128xf32>,
    return
  }
  func.func @transform_0(%arg0: i32) -> (i32, i32) {
    %c0_i32 = arith.constant 0 : i32
    %c0_i32_0 = arith.constant 0 : i32
    return %arg0, %c0_i32 : i32, i32
  }
  func.func @transform_1(%arg0: i32) -> (i32, i32) {
    %c0_i32 = arith.constant 0 : i32
    %c0_i32_0 = arith.constant 0 : i32
    %c0_i32_1 = arith.constant 0 : i32
    return %c0_i32, %c0_i32_0 : i32, i32
  }
  func.func @transform_2(%arg0: i32) -> (i32, i32) {
    %c0_i32 = arith.constant 0 : i32
    %c0_i32_0 = arith.constant 0 : i32
    return %arg0, %c0_i32 : i32, i32
  }
}

</mosaic_0001>

<llo_original>
// kernel: tpu_custom_call.1
$region0: #{tpu_custom_call.1}
  #allocation0 [shape = 'u32[]', space=smem, size = 0x4, offset = 0x4, fixed_abs, tag = 'smem constant byte address 0x4 - core index']
  #allocation1 [shape = 'u32[72,128]{1,0:T(1,128)}', space=vmem, size = 0x9000, scoped, tag = 'internal scratch']
  %s0 = inlined_call_operand.hbm [shape: f32[4,128], index: 0, kind: input, shape index: {}]
  %s1 = inlined_call_operand.hbm [shape: f32[128,128], index: 1, kind: input, shape index: {}]
  %s2 = inlined_call_operand.hbm [shape: f32[4,128], index: 2, kind: output, shape index: {}]
  %s3 = sld [smem:[#allocation0]]
  $region26: #{tpu_custom_call.1} parent=0
    _
  %s5 = ssub.s32 1, %s3
  %s6 = scalar_select 0, %s5, %s3
  $region1: #{tpu_custom_call.1} parent=0
    #allocation2 [shape = 'u8[2048]{0}', space=vmem, size = 0x800, scoped, tag = 'input window, operand 0, single buffered']
    #allocation3 [shape = 's32[1]{0}', space=sflag, size = 0x4, scoped, tag = 'scoped memory for tpu_custom_call.1']
    #allocation4 [shape = 's32[1]{0}', space=sflag, size = 0x4, scoped, tag = 'scoped memory for tpu_custom_call.1']
    #allocation5 [shape = 'u8[65536]{0}', space=vmem, size = 0x10000, scoped, tag = 'input window, operand 1, single buffered']
    #allocation6 [shape = 's32[1]{0}', space=sflag, size = 0x4, scoped, tag = 'scoped memory for tpu_custom_call.1']
    #allocation7 [shape = 'u8[2048]{0}', space=vmem, size = 0x800, scoped, tag = 'output window, operand 0, single buffered']
    %7 = vsyncpa [#allocation3], 0
    %8 = vsyncpa [#allocation6], 0
    %9 = vsyncpa [#allocation4], 0
    // Predicated region
    $region2: #{tpu_custom_call.1} parent=1 // pred_check
      _
    $region3: #{tpu_custom_call.1} parent=1 // pred_check_branch
      %11 = sbr.rel (0) target = $region5
    $region4: #{tpu_custom_call.1} parent=1 // pred_region
      %13 = vsyncadd [#allocation3], 0
      %s15 = sshll.u32 %s0, 4
      %s16 = int_to_ptr.hbm [resolvable:$true] %s15
      %s17 = sshll.u32 [#allocation2], 4
      %s18 = int_to_ptr.vmem [resolvable:$true] %s17
      %20 = dma.hbm_to_vmem [thread:$0]  %s16, 64, %s18, [#allocation3]
    $region5: #{tpu_custom_call.1} parent=1 // pred_fallthru
      _
    // Predicated region
    $region6: #{tpu_custom_call.1} parent=1 // pred_check
      _
    $region7: #{tpu_custom_call.1} parent=1 // pred_check_branch
      %22 = sbr.rel (0) target = $region9
    $region8: #{tpu_custom_call.1} parent=1 // pred_region
      %24 = vsyncadd [#allocation6], 0
      %s25 = sshll.u32 %s1, 4
      %s26 = int_to_ptr.hbm [resolvable:$true] %s25
      %s27 = sshll.u32 [#allocation5], 4
      %s28 = int_to_ptr.vmem [resolvable:$true] %s27
      %33 = dma.hbm_to_vmem [thread:$0]  %s26, 2048, %s28, [#allocation6], 128, 128, 8
    $region9: #{tpu_custom_call.1} parent=1 // pred_fallthru
      _
    // Predicated region
    $region10: #{tpu_custom_call.1} parent=1 // pred_check
      _
    $region11: #{tpu_custom_call.1} parent=1 // pred_check_branch
      %35 = sbr.rel (0) target = $region13
    $region12: #{tpu_custom_call.1} parent=1 // pred_region
      %37 = dma.done [#allocation3], 64
    $region13: #{tpu_custom_call.1} parent=1 // pred_fallthru
      _
    // Predicated region
    $region14: #{tpu_custom_call.1} parent=1 // pred_check
      _
    $region15: #{tpu_custom_call.1} parent=1 // pred_check_branch
      %39 = sbr.rel (0) target = $region17
    $region16: #{tpu_custom_call.1} parent=1 // pred_region
      %41 = dma.done [#allocation6], 2048
    $region17: #{tpu_custom_call.1} parent=1 // pred_fallthru
      _
    %v42 = vld [vmem:[#allocation2] sm:$0xf]
    %v43 = vld [vmem:[#allocation5] sm:$0xff]
    %v44 = vld [vmem:[#allocation5 + $0x8] sm:$0xff]
    %v45 = vld [vmem:[#allocation5 + $0x10] sm:$0xff]
    %v46 = vld [vmem:[#allocation5 + $0x18] sm:$0xff]
    %v47 = vld [vmem:[#allocation5 + $0x20] sm:$0xff]
    %v48 = vld [vmem:[#allocation5 + $0x28] sm:$0xff]
    %v49 = vld [vmem:[#allocation5 + $0x30] sm:$0xff]
    %v50 = vld [vmem:[#allocation5 + $0x38] sm:$0xff]
    %v51 = vld [vmem:[#allocation5 + $0x40] sm:$0xff]
    %v52 = vld [vmem:[#allocation5 + $0x48] sm:$0xff]
    %v53 = vld [vmem:[#allocation5 + $0x50] sm:$0xff]
    %v54 = vld [vmem:[#allocation5 + $0x58] sm:$0xff]
    %v55 = vld [vmem:[#allocation5 + $0x60] sm:$0xff]
    %v56 = vld [vmem:[#allocation5 + $0x68] sm:$0xff]
    %v57 = vld [vmem:[#allocation5 + $0x70] sm:$0xff]
    %v58 = vld [vmem:[#allocation5 + $0x78] sm:$0xff]
    %v59 = vmul.f32 %v42, %v42
    %v60 = vpack.c.bf16 %v59, %v59
    %v61 = vunpack.c.l.bf16 %v60
    %v62 = vsub.f32 %v59, %v61
    %63 = vmatpush.msra.mxu0 %v58
    %64 = vmatpush.msra.mxu0 %v57
    %65 = vmatpush.msra.mxu0 %v56
    %66 = vmatpush.msra.mxu0 %v55
    %67 = vmatpush.msra.mxu0 %v54
    %68 = vmatpush.msra.mxu0 %v53
    %69 = vmatpush.msra.mxu0 %v52
    %70 = vmatpush.msra.mxu0 %v51
    %71 = vmatpush.msra.mxu0 %v50
    %72 = vmatpush.msra.mxu0 %v49
    %73 = vmatpush.msra.mxu0 %v48
    %74 = vmatpush.msra.mxu0 %v47
    %75 = vmatpush.msra.mxu0 %v46
    %76 = vmatpush.msra.mxu0 %v45
    %77 = vmatpush.msra.mxu0 %v44
    %78 = vmatpush.msra.mxu0 %v43
    %79 = vmatmul.f32.gmra.mxu0 %v62
    %v80 = vpop.f32.mrf.mxu0
    %v81 = vadd.f32 0.0, %v80
    %82 = vdwg.mxu0
    %83 = vmatpush.msra.mxu0 %v58
    %84 = vmatpush.msra.mxu0 %v57
    %85 = vmatpush.msra.mxu0 %v56
    %86 = vmatpush.msra.mxu0 %v55
    %87 = vmatpush.msra.mxu0 %v54
    %88 = vmatpush.msra.mxu0 %v53
    %89 = vmatpush.msra.mxu0 %v52
    %90 = vmatpush.msra.mxu0 %v51
    %91 = vmatpush.msra.mxu0 %v50
    %92 = vmatpush.msra.mxu0 %v49
    %93 = vmatpush.msra.mxu0 %v48
    %94 = vmatpush.msra.mxu0 %v47
    %95 = vmatpush.msra.mxu0 %v46
    %96 = vmatpush.msra.mxu0 %v45
    %97 = vmatpush.msra.mxu0 %v44
    %98 = vmatpush.msra.mxu0 %v43
    %99 = vmatmul.f32.gmra.mxu0 %v61
    %v100 = vpop.f32.mrf.mxu0
    %v101 = vadd.f32 %v81, %v100
    %102 = vdwg.mxu0
    %v103 = vrsqrt.pop %v101
    %v104 = vmul.f32 %v103, %v101
    %v105 = vmul.f32 %v104, %v103
    %v106 = vmul.f32 0.5, %v105
    %v107 = vsub.f32 1.5, %v106
    %v108 = vmul.f32 %v103, %v107
    %vm109 = vweird.f32 %v101
    %vm110 = vweird.f32 %v103
    %vm111 = vmor %vm109, %vm110
    %v112 = vsel %vm111, %v103, %v108
    %v113 = vmul.f32 %v42, %v112
    %114 = vst [vmem:[#allocation7] sm:$0xf] %v113
    // Predicated region
    $region18: #{tpu_custom_call.1} parent=1 // pred_check
      _
    $region19: #{tpu_custom_call.1} parent=1 // pred_check_branch
      %116 = sbr.rel (0) target = $region21
    $region20: #{tpu_custom_call.1} parent=1 // pred_region
      %118 = vsyncadd [#allocation4], 0
      %s120 = sshll.u32 [#allocation7], 4
      %s121 = int_to_ptr.vmem [resolvable:$true] %s120
      %s122 = sshll.u32 %s2, 4
      %s123 = int_to_ptr.hbm [resolvable:$true] %s122
      %125 = dma.vmem_to_hbm [thread:$0]  %s121, 64, %s123, [#allocation4]
    $region21: #{tpu_custom_call.1} parent=1 // pred_fallthru
      _
    // Predicated region
    $region22: #{tpu_custom_call.1} parent=1 // pred_check
      _
    $region23: #{tpu_custom_call.1} parent=1 // pred_check_branch
      %127 = sbr.rel (0) target = $region25
    $region24: #{tpu_custom_call.1} parent=1 // pred_region
      %129 = dma.done [#allocation4], 64
    $region25: #{tpu_custom_call.1} parent=1 // pred_fallthru
      _
    %130 = vsyncpa [#allocation3], 1
    %131 = vsyncpa [#allocation6], 1
    %132 = vsyncpa [#allocation4], 1

</llo_original>
